<compile_context>
chip_gen: v6e
topology: v6e:2x2x1
jax: 0.10.0
libtpu: 0.0.40
codegen_flags: <defaults>
</compile_context>

<pallas_src>
import jax
import jax.numpy as jnp
from jax.experimental import pallas as pl
from jax.experimental.pallas import tpu as pltpu


# Sum of the six scalar subtractions from the PyTorch forward, folded into the
# bias (changes FP rounding order only at the ~1e-7 level vs sequential subs).
_SUB_TOTAL = 0.0001 + 0.01 + 2.3e-06 + 1.0 + 1.234 + 1.234e-05


def conv1x1_pad_kernel(x_ref, wb_ref, o_ref):
    """Fused 1x1 conv + padding=1 border + folded scalar-subtraction chain.

    x_ref : (Cin, H, W)      one input image (NCHW, batch dim squeezed)
    wb_ref: (Cout, Cin + 1)  [:, :Cin] = conv weights, [:, Cin] = adjusted bias
    o_ref : (Cout, Hp, Wp)   padded output image, Hp = H + 2, Wp = W + 2
    """
    cin, h, w_dim = x_ref.shape
    cout, hp, wp = o_ref.shape

    wmat = wb_ref[:, :cin]                   # (Cout, Cin)
    b3 = wb_ref[:, cin:cin + 1][:, :, None]  # (Cout, 1, 1) adjusted bias

    # 1) Border pixels of a 1x1 conv with padding=1 see only zero inputs, so
    #    they are exactly the adjusted bias.  Fill the whole block once; the
    #    interior is overwritten below (extra store is VMEM-only, the HBM
    #    writeback of this block still happens exactly once).
    o_ref[...] = jnp.broadcast_to(b3, (cout, hp, wp))

    # 2) Interior: per-pixel contraction over Cin as unrolled broadcast FMAs
    #    on the VPU (Cin=3 / Cout=8 would get <3% MXU utilization).
    x = x_ref[...]
    acc = jnp.broadcast_to(b3, (cout, h, w_dim)).astype(jnp.float32)
    for k in range(cin):                       # static & tiny -> unrolled
        wk = wmat[:, k:k + 1][:, :, None]      # (Cout, 1, 1), no 1-D temps
        acc = acc + wk * x[k]
    o_ref[:, 1:1 + h, 1:1 + w_dim] = acc.astype(o_ref.dtype)


def model_forward(x, weight, bias):
    """x: (N, 3, H, W) f32; weight: (8, 3, 1, 1); bias: (8,).

    Equivalent to Conv2d(3, 8, 1, stride=1, padding=1)(x) followed by the six
    scalar subtractions of the PyTorch module.
    """
    N, Cin, H, W = x.shape
    Cout = weight.shape[0]
    Hp, Wp = H + 2, W + 2

    w_mat = weight.reshape(Cout, Cin).astype(jnp.float32)          # (Cout, Cin)
    b_adj = bias.astype(jnp.float32) - jnp.float32(_SUB_TOTAL)     # (Cout,)
    wb = jnp.concatenate([w_mat, b_adj[:, None]], axis=1)          # (Cout, Cin+1)

    # One whole image per grid step: no ragged tiles, no input pad, no
    # post-kernel epilogue.  Batch axis is "parallel" (N>=2 feeds both v7x
    # TensorCores; v5e/v6e have a single TC so one big step per image is fine).
    # Per-step VMEM (double-buffered in + out) stays well under the 32 MiB
    # scoped default for typical image sizes.
    return pl.pallas_call(
        conv1x1_pad_kernel,
        out_shape=jax.ShapeDtypeStruct((N, Cout, Hp, Wp), jnp.float32),
        grid=(N,),
        in_specs=[
            pl.BlockSpec((None, Cin, H, W), lambda n: (n, 0, 0, 0)),
            pl.BlockSpec((Cout, Cin + 1), lambda n: (0, 0)),
        ],
        out_specs=pl.BlockSpec((None, Cout, Hp, Wp), lambda n: (n, 0, 0, 0)),
        compiler_params=pltpu.CompilerParams(
            dimension_semantics=("parallel",)),
    )(x.astype(jnp.float32), wb)


def _reference(x, weight, bias):
    """Pure-JAX reference matching the literal PyTorch op order."""
    N, Cin, H, W = x.shape
    Cout = weight.shape[0]
    xp = jnp.pad(x, ((0, 0), (0, 0), (1, 1), (1, 1)))
    w5 = weight.reshape(1, Cout, Cin, 1, 1)
    v1 = (xp[:, None] * w5).sum(axis=2) + bias.reshape(1, Cout, 1, 1)
    return v1 - 0.0001 - 0.01 - 2.3e-06 - 1.0 - 1.234 - 1.234e-05


if __name__ == "__main__":
    key = jax.random.PRNGKey(0)
    k_x, k_w, k_b = jax.random.split(key, 3)

    # Small shapes consistent with the module (Cin=3, Cout=8 required).
    N, Cin, H, W = 2, 3, 16, 16
    Cout = 8

    x = jax.random.normal(k_x, (N, Cin, H, W), dtype=jnp.float32)
    # Deterministic parameter init (PyTorch-style uniform bound 1/sqrt(fan_in)).
    bound = 1.0 / (Cin * 1 * 1) ** 0.5
    weight = jax.random.uniform(k_w, (Cout, Cin, 1, 1), dtype=jnp.float32,
                                minval=-bound, maxval=bound)
    bias = jax.random.uniform(k_b, (Cout,), dtype=jnp.float32,
                              minval=-bound, maxval=bound)

    out = jax.jit(model_forward)(x, weight, bias)
    jax.block_until_ready(out)

    # Conv2d(3,8,1,padding=1) on (N,3,16,16) -> (N,8,18,18)
    assert out.shape == (N, Cout, H + 2, W + 2), out.shape

    ref = _reference(x, weight, bias)
    max_err = float(jnp.max(jnp.abs(out - ref)))
    assert jnp.allclose(out, ref, atol=1e-5, rtol=1e-5), max_err

    print("KERNEL_OK")
</pallas_src>

<mosaic_0001>
module attributes {stable_mosaic.version = 11 : i64} {
  func.func @conv1x1_pad_kernel(%arg0: i32, %arg1: memref<1x3x16x16xf32, #tpu.memory_space<vmem>>, %arg2: memref<8x4xf32, #tpu.memory_space<vmem>>, %arg3: memref<1x8x18x18xf32, #tpu.memory_space<vmem>>) attributes {dimension_semantics = [#tpu.dimension_semantics<parallel>], iteration_bounds = array<i64: 2>, scalar_prefetch = 0 : i64, scratch_operands = 0 : i64, tpu.core_type = #tpu.core_type<tc>, window_params = [{transform_indices = @transform_0, window_bounds = array<i64: 1, 3, 16, 16>}, {pipeline_mode = #tpu.pipeline_mode<synchronous>, transform_indices = @transform_1, window_bounds = array<i64: 8, 4>}, {transform_indices = @transform_2, window_bounds = array<i64: 1, 8, 18, 18>}]} {
    %c0 = arith.constant 0 : index
    %c0_0 = arith.constant 0 : index
    %0 = vector.load %arg2[%c0, %c0_0] : memref<8x4xf32, #tpu.memory_space<vmem>>, vector<8x3xf32>
    %c0_1 = arith.constant 0 : index
    %c3 = arith.constant 3 : index
    %1 = vector.load %arg2[%c0_1, %c3] : memref<8x4xf32, #tpu.memory_space<vmem>>, vector<8x1xf32>
    %2 = vector.shape_cast %1 : vector<8x1xf32> to vector<8x1x1xf32>
    %3 = vector.shape_cast %2 : vector<8x1x1xf32> to vector<8x1x1xf32>
    %4 = vector.broadcast %3 : vector<8x1x1xf32> to vector<8x18x18xf32>
    %c0_2 = arith.constant 0 : index
    %c0_3 = arith.constant 0 : index
    %c0_4 = arith.constant 0 : index
    %c0_5 = arith.constant 0 : index
    %5 = vector.load %arg3[%c0_2, %c0_3, %c0_4, %c0_5] : memref<1x8x18x18xf32, #tpu.memory_space<vmem>>, vector<1x8x18x18xf32>
    %6 = vector.shape_cast %5 : vector<1x8x18x18xf32> to vector<8x18x18xf32>
    %7 = vector.shape_cast %4 : vector<8x18x18xf32> to vector<1x8x18x18xf32>
    tpu.vector_store %arg3[%c0_2, %c0_3, %c0_4, %c0_5], %7 {strides = array<i32>} : memref<1x8x18x18xf32, #tpu.memory_space<vmem>>, vector<1x8x18x18xf32>,
    %c0_6 = arith.constant 0 : index
    %c0_7 = arith.constant 0 : index
    %c0_8 = arith.constant 0 : index
    %c0_9 = arith.constant 0 : index
    %8 = vector.load %arg1[%c0_6, %c0_7, %c0_8, %c0_9] : memref<1x3x16x16xf32, #tpu.memory_space<vmem>>, vector<1x3x16x16xf32>
    %9 = vector.shape_cast %8 : vector<1x3x16x16xf32> to vector<3x16x16xf32>
    %10 = vector.shape_cast %2 : vector<8x1x1xf32> to vector<8x1x1xf32>
    %11 = vector.broadcast %10 : vector<8x1x1xf32> to vector<8x16x16xf32>
    %12 = vector.extract_strided_slice %0 {offsets = [0, 0], sizes = [8, 1], strides = [1, 1]} : vector<8x3xf32> to vector<8x1xf32>
    %13 = vector.shape_cast %12 : vector<8x1xf32> to vector<8x1x1xf32>
    %14 = vector.extract_strided_slice %9 {offsets = [0, 0, 0], sizes = [1, 16, 16], strides = [1, 1, 1]} : vector<3x16x16xf32> to vector<1x16x16xf32>
    %15 = vector.shape_cast %14 : vector<1x16x16xf32> to vector<16x16xf32>
    %16 = vector.shape_cast %15 : vector<16x16xf32> to vector<1x16x16xf32>
    %17 = vector.broadcast %13 : vector<8x1x1xf32> to vector<8x16x16xf32>
    %18 = vector.broadcast %16 : vector<1x16x16xf32> to vector<8x16x16xf32>
    %19 = arith.mulf %17, %18 : vector<8x16x16xf32>
    %20 = arith.addf %11, %19 : vector<8x16x16xf32>
    %21 = vector.extract_strided_slice %0 {offsets = [0, 1], sizes = [8, 1], strides = [1, 1]} : vector<8x3xf32> to vector<8x1xf32>
    %22 = vector.shape_cast %21 : vector<8x1xf32> to vector<8x1x1xf32>
    %23 = vector.extract_strided_slice %9 {offsets = [1, 0, 0], sizes = [1, 16, 16], strides = [1, 1, 1]} : vector<3x16x16xf32> to vector<1x16x16xf32>
    %24 = vector.shape_cast %23 : vector<1x16x16xf32> to vector<16x16xf32>
    %25 = vector.shape_cast %24 : vector<16x16xf32> to vector<1x16x16xf32>
    %26 = vector.broadcast %22 : vector<8x1x1xf32> to vector<8x16x16xf32>
    %27 = vector.broadcast %25 : vector<1x16x16xf32> to vector<8x16x16xf32>
    %28 = arith.mulf %26, %27 : vector<8x16x16xf32>
    %29 = arith.addf %20, %28 : vector<8x16x16xf32>
    %30 = vector.extract_strided_slice %0 {offsets = [0, 2], sizes = [8, 1], strides = [1, 1]} : vector<8x3xf32> to vector<8x1xf32>
    %31 = vector.shape_cast %30 : vector<8x1xf32> to vector<8x1x1xf32>
    %32 = vector.extract_strided_slice %9 {offsets = [2, 0, 0], sizes = [1, 16, 16], strides = [1, 1, 1]} : vector<3x16x16xf32> to vector<1x16x16xf32>
    %33 = vector.shape_cast %32 : vector<1x16x16xf32> to vector<16x16xf32>
    %34 = vector.shape_cast %33 : vector<16x16xf32> to vector<1x16x16xf32>
    %35 = vector.broadcast %31 : vector<8x1x1xf32> to vector<8x16x16xf32>
    %36 = vector.broadcast %34 : vector<1x16x16xf32> to vector<8x16x16xf32>
    %37 = arith.mulf %35, %36 : vector<8x16x16xf32>
    %38 = arith.addf %29, %37 : vector<8x16x16xf32>
    %c0_10 = arith.constant 0 : index
    %c0_11 = arith.constant 0 : index
    %c1 = arith.constant 1 : index
    %c1_12 = arith.constant 1 : index
    %39 = vector.load %arg3[%c0_10, %c0_11, %c1, %c1_12] : memref<1x8x18x18xf32, #tpu.memory_space<vmem>>, vector<1x8x16x16xf32>
    %40 = vector.shape_cast %39 : vector<1x8x16x16xf32> to vector<8x16x16xf32>
    %41 = vector.shape_cast %38 : vector<8x16x16xf32> to vector<1x8x16x16xf32>
    tpu.vector_store %arg3[%c0_10, %c0_11, %c1, %c1_12], %41 {strides = array<i32>} : memref<1x8x18x18xf32, #tpu.memory_space<vmem>>, vector<1x8x16x16xf32>,
    return
  }
  func.func @transform_0(%arg0: i32) -> (i32, i32, i32, i32) {
    %c0_i32 = arith.constant 0 : i32
    %c0_i32_0 = arith.constant 0 : i32
    %c0_i32_1 = arith.constant 0 : i32
    %c0_i32_2 = arith.constant 0 : i32
    return %arg0, %c0_i32, %c0_i32_0, %c0_i32_1 : i32, i32, i32, i32
  }
  func.func @transform_1(%arg0: i32) -> (i32, i32) {
    %c0_i32 = arith.constant 0 : i32
    %c0_i32_0 = arith.constant 0 : i32
    %c0_i32_1 = arith.constant 0 : i32
    return %c0_i32, %c0_i32_0 : i32, i32
  }
  func.func @transform_2(%arg0: i32) -> (i32, i32, i32, i32) {
    %c0_i32 = arith.constant 0 : i32
    %c0_i32_0 = arith.constant 0 : i32
    %c0_i32_1 = arith.constant 0 : i32
    %c0_i32_2 = arith.constant 0 : i32
    return %arg0, %c0_i32, %c0_i32_0, %c0_i32_1 : i32, i32, i32, i32
  }
}

</mosaic_0001>

<llo_original>
// kernel: model_forward.1
$region0: #{model_forward.1}
  #allocation0 [shape = 'u32[]', space=smem, size = 0x4, offset = 0x4, fixed_abs, tag = 'smem constant byte address 0x4 - core index']
  #allocation1 [shape = 'u32[144,128]{1,0:T(1,128)}', space=vmem, size = 0x12000, scoped, tag = 'internal scratch']
  %s0 = inlined_call_operand.hbm [shape: f32[2,3,16,16], index: 0, kind: input, shape index: {}]
  %s1 = inlined_call_operand.vmem [shape: f32[8,4], index: 1, kind: input, shape index: {}]
  %s2 = inlined_call_operand.vmem [shape: f32[2,8,18,18], index: 2, kind: output, shape index: {}]
  %s3 = sld [smem:[#allocation0]]
  $region45: #{model_forward.1} parent=0
    _
  %s5 = ssub.s32 1, %s3
  %s6 = scalar_select 0, %s5, %s3
  $region1: #{model_forward.1} parent=0
    #allocation2 [shape = 'u8[49152]{0}', space=vmem, size = 0xc000, scoped, tag = 'input window, operand 0']
    #allocation3 [shape = 's32[2]{0}', space=sflag, size = 0x8, scoped, tag = 'scoped memory for model_forward.1']
    %7 = vsyncpa [#allocation3], 0
    %s8 = scalar_lea.sflag [#allocation3], 1
    %9 = vsyncpa %s8, 0
    loop: start=0, step=1, limit=4
    $region2: #{model_forward.1} parent=1 // loop_pre_header
      _
    $region3: #{model_forward.1} parent=1 // loop_header
      %s11 = sphi 0, %s15
      %p12 = scmp.ge.s32.totalorder %s11, 4
      %s21 = sphi 0, %s23
      %s24 = sphi 0, %s21
      %s25 = sphi 0, %s24
      %s41 = sphi 0, %s25
      %s45 = sphi 0, %s45
      %s47 = sphi 0, %s45
      %s48 = sphi 0, %s47
      %s62 = sphi 0, %s48
      %s68 = sphi 0, %s70
      %s71 = sphi 0, %s68
      %s72 = sphi 0, %s71
      %s88 = sphi 0, %s72
    $region4: #{model_forward.1} parent=1 // loop_header_branch
      %14 = sbr.rel (%p12) target = $region8
    $region5: #{model_forward.1} parent=1 // loop_body
      %s16 = ssub.s32 %s11, 1
      %s17 = ssub.s32 %s11, 2
      %s18 = sadd.s32 %s11, 1
      %s19 = ssub.s32 %s11, %s18
      %p20 = scmp.eq.s32.totalorder %s19, 0
      %s22 = sadd.s32 %s21, 1
      %s23 = scalar_select %p20, %s21, %s22
      %p26 = pneg %p20
      %p27 = scmp.eq.s32.totalorder %s11, 1
      %p28 = por %p26, %p27
      %p29 = scmp.ne.s32.totalorder %s21, %s24
      %p30 = scmp.eq.s32.totalorder %s11, 0
      %p31 = por %p29, %p30
      %p32 = scmp.ne.s32.totalorder %s21, %s24
      %p33 = scmp.eq.s32.totalorder %s16, 1
      %p34 = por %p32, %p33
      %p35 = scmp.ne.s32.totalorder %s24, %s25
      %p36 = scmp.eq.s32.totalorder %s16, 0
      %p37 = por %p35, %p36
      %p38 = scmp.ne.s32.totalorder %s24, %s25
      %p39 = scmp.eq.s32.totalorder %s17, 1
      %p40 = por %p38, %p39
      %p42 = scmp.ne.s32.totalorder %s25, %s41
      %p43 = scmp.eq.s32.totalorder %s17, 0
      %p44 = por %p42, %p43
      %s46 = sadd.s32 %s45, 1
      %p49 = scmp.eq.s32.totalorder %s11, 1
      %p50 = scmp.ne.s32.totalorder %s45, %s47
      %p51 = scmp.eq.s32.totalorder %s11, 0
      %p52 = por %p50, %p51
      %p53 = scmp.ne.s32.totalorder %s45, %s47
      %p54 = scmp.eq.s32.totalorder %s16, 1
      %p55 = por %p53, %p54
      %p56 = scmp.ne.s32.totalorder %s47, %s48
      %p57 = scmp.eq.s32.totalorder %s16, 0
      %p58 = por %p56, %p57
      %p59 = scmp.ne.s32.totalorder %s47, %s48
      %p60 = scmp.eq.s32.totalorder %s17, 1
      %p61 = por %p59, %p60
      %p63 = scmp.ne.s32.totalorder %s48, %s62
      %p64 = scmp.eq.s32.totalorder %s17, 0
      %p65 = por %p63, %p64
      %s66 = ssub.s32 %s11, %s18
      %p67 = scmp.eq.s32.totalorder %s66, 0
      %s69 = sadd.s32 %s68, 1
      %s70 = scalar_select %p67, %s68, %s69
      %p73 = pneg %p67
      %p74 = scmp.eq.s32.totalorder %s11, 1
      %p75 = por %p73, %p74
      %p76 = scmp.ne.s32.totalorder %s68, %s71
      %p77 = scmp.eq.s32.totalorder %s11, 0
      %p78 = por %p76, %p77
      %p79 = scmp.ne.s32.totalorder %s68, %s71
      %p80 = scmp.eq.s32.totalorder %s16, 1
      %p81 = por %p79, %p80
      %p82 = scmp.ne.s32.totalorder %s71, %s72
      %p83 = scmp.eq.s32.totalorder %s16, 0
      %p84 = por %p82, %p83
      %p85 = scmp.ne.s32.totalorder %s71, %s72
      %p86 = scmp.eq.s32.totalorder %s17, 1
      %p87 = por %p85, %p86
      %p89 = scmp.ne.s32.totalorder %s72, %s88
      %p90 = scmp.eq.s32.totalorder %s17, 0
      %p91 = por %p89, %p90
      %p92 = scmp.le.s32.totalorder 1, %s11
      %p93 = scmp.lt.s32.totalorder %s11, 3
      %p94 = pnand %p92, %p93
      %p95 = pneg %p94
      // Predicated region
      $region9: #{model_forward.1} parent=5 // pred_check
        _
      $region10: #{model_forward.1} parent=5 // pred_check_branch
        %97 = sbr.rel (%p94) target = $region12
      $region11: #{model_forward.1} parent=5 // pred_region
        %s98 = ssub.s32 %s11, 1
        // Predicated region
        $region13: #{model_forward.1} parent=11 // pred_check
          %p99 = pneg %p58
        $region14: #{model_forward.1} parent=11 // pred_check_branch
          %101 = sbr.rel (%p99) target = $region16
        $region15: #{model_forward.1} parent=11 // pred_region
          _
        $region16: #{model_forward.1} parent=11 // pred_fallthru
          _
      $region12: #{model_forward.1} parent=5 // pred_fallthru
        _
      %p102 = scmp.lt.s32.totalorder %s11, 2
      // Predicated region
      $region17: #{model_forward.1} parent=5 // pred_check
        %p103 = pneg %p102
      $region18: #{model_forward.1} parent=5 // pred_check_branch
        %105 = sbr.rel (%p103) target = $region20
      $region19: #{model_forward.1} parent=5 // pred_region
        // Predicated region
        $region21: #{model_forward.1} parent=19 // pred_check
          %p106 = pneg %p31
        $region22: #{model_forward.1} parent=19 // pred_check_branch
          %108 = sbr.rel (%p106) target = $region24
        $region23: #{model_forward.1} parent=19 // pred_region
          %s109 = sand.u32 %s21, 1
          %s110 = scalar_lea.sflag [#allocation3], %s109
          %s111 = sand.u32 %s21, 1
          %s112 = smul.addr %s111, 48
          %s113 = scalar_lea.vmem [#allocation2], %s112
          %s115 = ssub.s32 768, 768
          %116 = vsyncadd %s110, %s115
          %s117 = smul.addr %s11, 6
          %s118 = smul.addr %s117, 128
          %s119 = scalar_lea.hbm %s0, %s118
          %s120 = sshll.u32 %s113, 4
          %s121 = int_to_ptr.vmem [resolvable:$true] %s120
          %126 = dma.hbm_to_vmem [thread:$0]  %s119, 768, %s121, %s110, 128, 128, 8
        $region24: #{model_forward.1} parent=19 // pred_fallthru
          _
      $region20: #{model_forward.1} parent=5 // pred_fallthru
        _
      %p127 = scmp.le.s32.totalorder 1, %s11
      %p128 = scmp.lt.s32.totalorder %s11, 3
      %p129 = pnand %p127, %p128
      %p130 = pneg %p129
      // Predicated region
      $region25: #{model_forward.1} parent=5 // pred_check
        _
      $region26: #{model_forward.1} parent=5 // pred_check_branch
        %132 = sbr.rel (%p129) target = $region28
      $region27: #{model_forward.1} parent=5 // pred_region
        %s133 = ssub.s32 %s11, 1
        %s134 = sand.u32 %s24, 1
        %s135 = scalar_lea.sflag [#allocation3], %s134
        %s136 = sand.u32 %s24, 1
        %s137 = smul.addr %s136, 48
        %s138 = scalar_lea.vmem [#allocation2], %s137
        // Predicated region
        $region29: #{model_forward.1} parent=27 // pred_check
          %p139 = pneg %p37
        $region30: #{model_forward.1} parent=27 // pred_check_branch
          %141 = sbr.rel (%p139) target = $region32
        $region31: #{model_forward.1} parent=27 // pred_region
          %142 = dma.done %s135, 768
        $region32: #{model_forward.1} parent=27 // pred_fallthru
          _
        %s143 = sand.u32 %s24, 1
        %s144 = scalar_lea.sflag [#allocation3], %s143
        %s145 = sand.u32 %s24, 1
        %s146 = smul.addr %s145, 48
        %s147 = scalar_lea.vmem [#allocation2], %s146
        %p148 = pneg %p37
        %p149 = pneg %p34
        %p150 = pneg %p58
        %p151 = pneg %p55
        %p152 = pneg %p84
        %p153 = pneg %p81
        %p154 = scmp.lt.s32.totalorder %s16, 1
        %s155 = scalar_select %p154, %s16, 1
        %s156 = smul.addr %s155, 24
        %s157 = smul.addr %s156, 8
        %s158 = scalar_lea.vmem %s2, %s157
        %p159 = scmp.lt.s32.totalorder %s16, 1
        %s160 = scalar_select %p159, %s16, 1
        %s161 = smul.addr %s160, 24
        %s162 = smul.addr %s161, 8
        %s163 = scalar_lea.vmem %s2, %s162
        %v164 = vld [vmem:[%s1] sm:$0xff]
        %v166 = vcombine.high %v164, %v164
        %v168 = vunpack.c.l.s4 1966171168
        %v169 = vunpack.c.0.s8 %v168
        %v170 = vlaneseq
        %v171 = vshrl.u32 %v170, 7
        %v172 = vsub.s32 %v169, %v171
        %v173 = vrot.slane %v164, %v172
        %v175 = vunpack.c.l.s4 1966171168
        %v176 = vunpack.c.0.s8 %v175
        %v177 = vlaneseq
        %v178 = vshrl.u32 %v177, 7
        %v179 = vsub.s32 %v176, %v178
        %v180 = vrot.slane %v166, %v179
        %v181 = vcombine.high %v173, %v173
        %v182 = vcombine.high %v180, %v180
        %v184 = vunpack.c.l.s4 1966171168
        %v185 = vunpack.c.0.s8 %v184
        %v186 = vlaneseq
        %v187 = vshrl.u32 %v186, 7
        %v188 = vsub.s32 %v185, %v187
        %v189 = vrot.slane %v173, %v188
        %v191 = vunpack.c.l.s4 1966171168
        %v192 = vunpack.c.0.s8 %v191
        %v193 = vlaneseq
        %v194 = vshrl.u32 %v193, 7
        %v195 = vsub.s32 %v192, %v194
        %v196 = vrot.slane %v180, %v195
        %v198 = vunpack.c.l.s4 1966171168
        %v199 = vunpack.c.0.s8 %v198
        %v200 = vlaneseq
        %v201 = vshrl.u32 %v200, 7
        %v202 = vsub.s32 %v199, %v201
        %v203 = vrot.slane %v181, %v202
        %v205 = vunpack.c.l.s4 1966171168
        %v206 = vunpack.c.0.s8 %v205
        %v207 = vlaneseq
        %v208 = vshrl.u32 %v207, 7
        %v209 = vsub.s32 %v206, %v208
        %v210 = vrot.slane %v182, %v209
        %v211 = vcombine.high %v189, %v189
        %v212 = vcombine.high %v196, %v196
        %v213 = vcombine.high %v203, %v203
        %v214 = vcombine.high %v210, %v210
        %v215 = vlaneseq
        %v216 = vshrl.u32 %v215, 7
        %v217 = vsub.s32 0, %v216
        %v218 = vrot.slane %v189, %v217
        %v219 = vlaneseq
        %v220 = vshrl.u32 %v219, 7
        %v221 = vsub.s32 0, %v220
        %v222 = vrot.slane %v203, %v221
        %v223 = vlaneseq
        %v224 = vshrl.u32 %v223, 7
        %v225 = vsub.s32 0, %v224
        %v226 = vrot.slane %v211, %v225
        %v227 = vlaneseq
        %v228 = vshrl.u32 %v227, 7
        %v229 = vsub.s32 0, %v228
        %v230 = vrot.slane %v213, %v229
        %v231 = vlaneseq
        %v232 = vshrl.u32 %v231, 7
        %v233 = vsub.s32 0, %v232
        %v234 = vrot.slane %v196, %v233
        %v235 = vlaneseq
        %v236 = vshrl.u32 %v235, 7
        %v237 = vsub.s32 0, %v236
        %v238 = vrot.slane %v210, %v237
        %v239 = vlaneseq
        %v240 = vshrl.u32 %v239, 7
        %v241 = vsub.s32 0, %v240
        %v242 = vrot.slane %v212, %v241
        %v243 = vlaneseq
        %v244 = vshrl.u32 %v243, 7
        %v245 = vsub.s32 0, %v244
        %v246 = vrot.slane %v214, %v245
        %247 = vset.pattern.permute.xlu0 3
        %248 = vperm.xlu0 %247, %v218
        %v249 = vpop.permute.xlu0 %248
        %251 = vset.pattern.permute.xlu0 3
        %252 = vperm.xlu0 %251, %v222
        %v253 = vpop.permute.xlu0 %252
        %255 = vset.pattern.permute.xlu0 3
        %256 = vperm.xlu0 %255, %v226
        %v257 = vpop.permute.xlu0 %256
        %259 = vset.pattern.permute.xlu0 3
        %260 = vperm.xlu0 %259, %v230
        %v261 = vpop.permute.xlu0 %260
        %263 = vset.pattern.permute.xlu0 3
        %264 = vperm.xlu0 %263, %v234
        %v265 = vpop.permute.xlu0 %264
        %267 = vset.pattern.permute.xlu0 3
        %268 = vperm.xlu0 %267, %v238
        %v269 = vpop.permute.xlu0 %268
        %271 = vset.pattern.permute.xlu0 3
        %272 = vperm.xlu0 %271, %v242
        %v273 = vpop.permute.xlu0 %272
        %275 = vset.pattern.permute.xlu0 3
        %276 = vperm.xlu0 %275, %v246
        %v277 = vpop.permute.xlu0 %276
        %vm279 = vcmask 146432
        %280 = vst.msk [vmem:[%s163] sm:$0xff] %vm279, %v249
        %281 = vst.msk [vmem:[%s163 + $0x8] sm:$0xff] %vm279, %v249
        %vm282 = vcmask 140288
        %283 = vst.msk [vmem:[%s163 + $0x10] sm:$0x3] %vm282, %v249
        %284 = vst.msk [vmem:[%s163 + $0x18] sm:$0xff] %vm279, %v253
        %285 = vst.msk [vmem:[%s163 + $0x20] sm:$0xff] %vm279, %v253
        %286 = vst.msk [vmem:[%s163 + $0x28] sm:$0x3] %vm282, %v253
        %287 = vst.msk [vmem:[%s163 + $0x30] sm:$0xff] %vm279, %v257
        %288 = vst.msk [vmem:[%s163 + $0x38] sm:$0xff] %vm279, %v257
        %289 = vst.msk [vmem:[%s163 + $0x40] sm:$0x3] %vm282, %v257
        %290 = vst.msk [vmem:[%s163 + $0x48] sm:$0xff] %vm279, %v261
        %291 = vst.msk [vmem:[%s163 + $0x50] sm:$0xff] %vm279, %v261
        %292 = vst.msk [vmem:[%s163 + $0x58] sm:$0x3] %vm282, %v261
        %293 = vst.msk [vmem:[%s163 + $0x60] sm:$0xff] %vm279, %v265
        %294 = vst.msk [vmem:[%s163 + $0x68] sm:$0xff] %vm279, %v265
        %295 = vst.msk [vmem:[%s163 + $0x70] sm:$0x3] %vm282, %v265
        %296 = vst.msk [vmem:[%s163 + $0x78] sm:$0xff] %vm279, %v269
        %297 = vst.msk [vmem:[%s163 + $0x80] sm:$0xff] %vm279, %v269
        %298 = vst.msk [vmem:[%s163 + $0x88] sm:$0x3] %vm282, %v269
        %299 = vst.msk [vmem:[%s163 + $0x90] sm:$0xff] %vm279, %v273
        %300 = vst.msk [vmem:[%s163 + $0x98] sm:$0xff] %vm279, %v273
        %301 = vst.msk [vmem:[%s163 + $0xa0] sm:$0x3] %vm282, %v273
        %302 = vst.msk [vmem:[%s163 + $0xa8] sm:$0xff] %vm279, %v277
        %303 = vst.msk [vmem:[%s163 + $0xb0] sm:$0xff] %vm279, %v277
        %304 = vst.msk [vmem:[%s163 + $0xb8] sm:$0x3] %vm282, %v277
        %v305 = vld [vmem:[%s138] sm:$0xff]
        %v306 = vld [vmem:[%s138 + $0x8] sm:$0xff]
        %v307 = vld [vmem:[%s138 + $0x10] sm:$0xff]
        %v308 = vld [vmem:[%s138 + $0x18] sm:$0xff]
        %v309 = vld [vmem:[%s138 + $0x20] sm:$0xff]
        %v310 = vld [vmem:[%s138 + $0x28] sm:$0xff]
        %311 = vset.pattern.permute.xlu0 3
        %312 = vperm.xlu0 %311, %v222
        %v313 = vpop.permute.xlu0 %312
        %315 = vset.pattern.permute.xlu0 3
        %316 = vperm.xlu0 %315, %v226
        %v317 = vpop.permute.xlu0 %316
        %319 = vset.pattern.permute.xlu0 3
        %320 = vperm.xlu0 %319, %v230
        %v321 = vpop.permute.xlu0 %320
        %323 = vset.pattern.permute.xlu0 3
        %324 = vperm.xlu0 %323, %v234
        %v325 = vpop.permute.xlu0 %324
        %327 = vset.pattern.permute.xlu0 3
        %328 = vperm.xlu0 %327, %v238
        %v329 = vpop.permute.xlu0 %328
        %331 = vset.pattern.permute.xlu0 3
        %332 = vperm.xlu0 %331, %v242
        %v333 = vpop.permute.xlu0 %332
        %335 = vset.pattern.permute.xlu0 3
        %336 = vperm.xlu0 %335, %v246
        %v337 = vpop.permute.xlu0 %336
        %339 = vset.pattern.permute.xlu0 0
        %340 = vperm.xlu0 %339, %v218
        %v341 = vpop.permute.xlu0 %340
        %343 = vset.pattern.permute.xlu0 0
        %344 = vperm.xlu0 %343, %v222
        %v345 = vpop.permute.xlu0 %344
        %347 = vset.pattern.permute.xlu0 0
        %348 = vperm.xlu0 %347, %v226
        %v349 = vpop.permute.xlu0 %348
        %351 = vset.pattern.permute.xlu0 0
        %352 = vperm.xlu0 %351, %v230
        %v353 = vpop.permute.xlu0 %352
        %355 = vset.pattern.permute.xlu0 0
        %356 = vperm.xlu0 %355, %v234
        %v357 = vpop.permute.xlu0 %356
        %359 = vset.pattern.permute.xlu0 0
        %360 = vperm.xlu0 %359, %v238
        %v361 = vpop.permute.xlu0 %360
        %363 = vset.pattern.permute.xlu0 0
        %364 = vperm.xlu0 %363, %v242
        %v365 = vpop.permute.xlu0 %364
        %367 = vset.pattern.permute.xlu0 0
        %368 = vperm.xlu0 %367, %v246
        %v369 = vpop.permute.xlu0 %368
        %v371 = vmul.f32 %v341, %v305
        %v372 = vmul.f32 %v341, %v306
        %v373 = vmul.f32 %v345, %v305
        %v374 = vmul.f32 %v345, %v306
        %v375 = vmul.f32 %v349, %v305
        %v376 = vmul.f32 %v349, %v306
        %v377 = vmul.f32 %v353, %v305
        %v378 = vmul.f32 %v353, %v306
        %v379 = vmul.f32 %v357, %v305
        %v380 = vmul.f32 %v357, %v306
        %v381 = vmul.f32 %v361, %v305
        %v382 = vmul.f32 %v361, %v306
        %v383 = vmul.f32 %v365, %v305
        %v384 = vmul.f32 %v365, %v306
        %v385 = vmul.f32 %v369, %v305
        %v386 = vmul.f32 %v369, %v306
        %v387 = vadd.f32 %v249, %v371
        %v388 = vadd.f32 %v249, %v372
        %v389 = vadd.f32 %v313, %v373
        %v390 = vadd.f32 %v313, %v374
        %v391 = vadd.f32 %v317, %v375
        %v392 = vadd.f32 %v317, %v376
        %v393 = vadd.f32 %v321, %v377
        %v394 = vadd.f32 %v321, %v378
        %v395 = vadd.f32 %v325, %v379
        %v396 = vadd.f32 %v325, %v380
        %v397 = vadd.f32 %v329, %v381
        %v398 = vadd.f32 %v329, %v382
        %v399 = vadd.f32 %v333, %v383
        %v400 = vadd.f32 %v333, %v384
        %v401 = vadd.f32 %v337, %v385
        %v402 = vadd.f32 %v337, %v386
        %403 = vset.pattern.permute.xlu0 1
        %404 = vperm.xlu0 %403, %v218
        %v405 = vpop.permute.xlu0 %404
        %407 = vset.pattern.permute.xlu0 1
        %408 = vperm.xlu0 %407, %v222
        %v409 = vpop.permute.xlu0 %408
        %411 = vset.pattern.permute.xlu0 1
        %412 = vperm.xlu0 %411, %v226
        %v413 = vpop.permute.xlu0 %412
        %415 = vset.pattern.permute.xlu0 1
        %416 = vperm.xlu0 %415, %v230
        %v417 = vpop.permute.xlu0 %416
        %419 = vset.pattern.permute.xlu0 1
        %420 = vperm.xlu0 %419, %v234
        %v421 = vpop.permute.xlu0 %420
        %423 = vset.pattern.permute.xlu0 1
        %424 = vperm.xlu0 %423, %v238
        %v425 = vpop.permute.xlu0 %424
        %427 = vset.pattern.permute.xlu0 1
        %428 = vperm.xlu0 %427, %v242
        %v429 = vpop.permute.xlu0 %428
        %431 = vset.pattern.permute.xlu0 1
        %432 = vperm.xlu0 %431, %v246
        %v433 = vpop.permute.xlu0 %432
        %v435 = vmul.f32 %v405, %v307
        %v436 = vmul.f32 %v405, %v308
        %v437 = vmul.f32 %v409, %v307
        %v438 = vmul.f32 %v409, %v308
        %v439 = vmul.f32 %v413, %v307
        %v440 = vmul.f32 %v413, %v308
        %v441 = vmul.f32 %v417, %v307
        %v442 = vmul.f32 %v417, %v308
        %v443 = vmul.f32 %v421, %v307
        %v444 = vmul.f32 %v421, %v308
        %v445 = vmul.f32 %v425, %v307
        %v446 = vmul.f32 %v425, %v308
        %v447 = vmul.f32 %v429, %v307
        %v448 = vmul.f32 %v429, %v308
        %v449 = vmul.f32 %v433, %v307
        %v450 = vmul.f32 %v433, %v308
        %v451 = vadd.f32 %v387, %v435
        %v452 = vadd.f32 %v388, %v436
        %v453 = vadd.f32 %v389, %v437
        %v454 = vadd.f32 %v390, %v438
        %v455 = vadd.f32 %v391, %v439
        %v456 = vadd.f32 %v392, %v440
        %v457 = vadd.f32 %v393, %v441
        %v458 = vadd.f32 %v394, %v442
        %v459 = vadd.f32 %v395, %v443
        %v460 = vadd.f32 %v396, %v444
        %v461 = vadd.f32 %v397, %v445
        %v462 = vadd.f32 %v398, %v446
        %v463 = vadd.f32 %v399, %v447
        %v464 = vadd.f32 %v400, %v448
        %v465 = vadd.f32 %v401, %v449
        %v466 = vadd.f32 %v402, %v450
        %467 = vset.pattern.permute.xlu0 2
        %468 = vperm.xlu0 %467, %v218
        %v469 = vpop.permute.xlu0 %468
        %471 = vset.pattern.permute.xlu0 2
        %472 = vperm.xlu0 %471, %v222
        %v473 = vpop.permute.xlu0 %472
        %475 = vset.pattern.permute.xlu0 2
        %476 = vperm.xlu0 %475, %v226
        %v477 = vpop.permute.xlu0 %476
        %479 = vset.pattern.permute.xlu0 2
        %480 = vperm.xlu0 %479, %v230
        %v481 = vpop.permute.xlu0 %480
        %483 = vset.pattern.permute.xlu0 2
        %484 = vperm.xlu0 %483, %v234
        %v485 = vpop.permute.xlu0 %484
        %487 = vset.pattern.permute.xlu0 2
        %488 = vperm.xlu0 %487, %v238
        %v489 = vpop.permute.xlu0 %488
        %491 = vset.pattern.permute.xlu0 2
        %492 = vperm.xlu0 %491, %v242
        %v493 = vpop.permute.xlu0 %492
        %495 = vset.pattern.permute.xlu0 2
        %496 = vperm.xlu0 %495, %v246
        %v497 = vpop.permute.xlu0 %496
        %v499 = vmul.f32 %v469, %v309
        %v500 = vmul.f32 %v469, %v310
        %v501 = vmul.f32 %v473, %v309
        %v502 = vmul.f32 %v473, %v310
        %v503 = vmul.f32 %v477, %v309
        %v504 = vmul.f32 %v477, %v310
        %v505 = vmul.f32 %v481, %v309
        %v506 = vmul.f32 %v481, %v310
        %v507 = vmul.f32 %v485, %v309
        %v508 = vmul.f32 %v485, %v310
        %v509 = vmul.f32 %v489, %v309
        %v510 = vmul.f32 %v489, %v310
        %v511 = vmul.f32 %v493, %v309
        %v512 = vmul.f32 %v493, %v310
        %v513 = vmul.f32 %v497, %v309
        %v514 = vmul.f32 %v497, %v310
        %v515 = vadd.f32 %v451, %v499
        %v516 = vadd.f32 %v452, %v500
        %v517 = vadd.f32 %v453, %v501
        %v518 = vadd.f32 %v454, %v502
        %v519 = vadd.f32 %v455, %v503
        %v520 = vadd.f32 %v456, %v504
        %v521 = vadd.f32 %v457, %v505
        %v522 = vadd.f32 %v458, %v506
        %v523 = vadd.f32 %v459, %v507
        %v524 = vadd.f32 %v460, %v508
        %v525 = vadd.f32 %v461, %v509
        %v526 = vadd.f32 %v462, %v510
        %v527 = vadd.f32 %v463, %v511
        %v528 = vadd.f32 %v464, %v512
        %v529 = vadd.f32 %v465, %v513
        %v530 = vadd.f32 %v466, %v514
        %547 = vrot.lane.b32.xlu0 %v515, 1
        %v548 = vpop.permute.xlu0 %547
        %549 = vrot.lane.b32.xlu0 %v516, 1
        %v550 = vpop.permute.xlu0 %549
        %551 = vrot.lane.b32.xlu0 %v517, 1
        %v552 = vpop.permute.xlu0 %551
        %553 = vrot.lane.b32.xlu0 %v518, 1
        %v554 = vpop.permute.xlu0 %553
        %555 = vrot.lane.b32.xlu0 %v519, 1
        %v556 = vpop.permute.xlu0 %555
        %557 = vrot.lane.b32.xlu0 %v520, 1
        %v558 = vpop.permute.xlu0 %557
        %559 = vrot.lane.b32.xlu0 %v521, 1
        %v560 = vpop.permute.xlu0 %559
        %561 = vrot.lane.b32.xlu0 %v522, 1
        %v562 = vpop.permute.xlu0 %561
        %563 = vrot.lane.b32.xlu0 %v523, 1
        %v564 = vpop.permute.xlu0 %563
        %565 = vrot.lane.b32.xlu0 %v524, 1
        %v566 = vpop.permute.xlu0 %565
        %567 = vrot.lane.b32.xlu0 %v525, 1
        %v568 = vpop.permute.xlu0 %567
        %569 = vrot.lane.b32.xlu0 %v526, 1
        %v570 = vpop.permute.xlu0 %569
        %571 = vrot.lane.b32.xlu0 %v527, 1
        %v572 = vpop.permute.xlu0 %571
        %573 = vrot.lane.b32.xlu0 %v528, 1
        %v574 = vpop.permute.xlu0 %573
        %575 = vrot.lane.b32.xlu0 %v529, 1
        %v576 = vpop.permute.xlu0 %575
        %577 = vrot.lane.b32.xlu0 %v530, 1
        %v578 = vpop.permute.xlu0 %577
        %vm595 = vcmask 138248
        %596 = vst.msk [vmem:[%s163 + $0x1] sm:$0xff] %vm595, %v548
        %597 = vst.msk [vmem:[%s163 + $0x9] sm:$0xff] %vm595, %v550
        %598 = vst.msk [vmem:[%s163 + $0x19] sm:$0xff] %vm595, %v552
        %599 = vst.msk [vmem:[%s163 + $0x21] sm:$0xff] %vm595, %v554
        %600 = vst.msk [vmem:[%s163 + $0x31] sm:$0xff] %vm595, %v556
        %601 = vst.msk [vmem:[%s163 + $0x39] sm:$0xff] %vm595, %v558
        %602 = vst.msk [vmem:[%s163 + $0x49] sm:$0xff] %vm595, %v560
        %603 = vst.msk [vmem:[%s163 + $0x51] sm:$0xff] %vm595, %v562
        %604 = vst.msk [vmem:[%s163 + $0x61] sm:$0xff] %vm595, %v564
        %605 = vst.msk [vmem:[%s163 + $0x69] sm:$0xff] %vm595, %v566
        %606 = vst.msk [vmem:[%s163 + $0x79] sm:$0xff] %vm595, %v568
        %607 = vst.msk [vmem:[%s163 + $0x81] sm:$0xff] %vm595, %v570
        %608 = vst.msk [vmem:[%s163 + $0x91] sm:$0xff] %vm595, %v572
        %609 = vst.msk [vmem:[%s163 + $0x99] sm:$0xff] %vm595, %v574
        %610 = vst.msk [vmem:[%s163 + $0xa9] sm:$0xff] %vm595, %v576
        %611 = vst.msk [vmem:[%s163 + $0xb1] sm:$0xff] %vm595, %v578
        %p612 = scmp.lt.s32.totalorder %s16, 1
        %s613 = scalar_select %p612, %s16, 1
        %s614 = smul.addr %s613, 24
        %s615 = smul.addr %s614, 8
        %s616 = scalar_lea.vmem %s2, %s615
        // Predicated region
        $region33: #{model_forward.1} parent=27 // pred_check
          %p617 = pneg %p81
        $region34: #{model_forward.1} parent=27 // pred_check_branch
          %619 = sbr.rel (%p617) target = $region36
        $region35: #{model_forward.1} parent=27 // pred_region
          _
        $region36: #{model_forward.1} parent=27 // pred_fallthru
          _
      $region28: #{model_forward.1} parent=5 // pred_fallthru
        _
      %p620 = scmp.le.s32.totalorder 2, %s11
      // Predicated region
      $region37: #{model_forward.1} parent=5 // pred_check
        %p621 = pneg %p620
      $region38: #{model_forward.1} parent=5 // pred_check_branch
        %623 = sbr.rel (%p621) target = $region40
      $region39: #{model_forward.1} parent=5 // pred_region
        %s624 = ssub.s32 %s11, 2
        // Predicated region
        $region41: #{model_forward.1} parent=39 // pred_check
          %p625 = pneg %p87
        $region42: #{model_forward.1} parent=39 // pred_check_branch
          %627 = sbr.rel (%p625) target = $region44
        $region43: #{model_forward.1} parent=39 // pred_region
          %p628 = scmp.lt.s32.totalorder %s17, 1
          %s629 = scalar_select %p628, %s17, 1
          %s630 = smul.addr %s629, 24
          %s631 = smul.addr %s630, 8
          %s632 = scalar_lea.vmem %s2, %s631
        $region44: #{model_forward.1} parent=39 // pred_fallthru
          _
      $region40: #{model_forward.1} parent=5 // pred_fallthru
        _
    $region6: #{model_forward.1} parent=1 // loop_footer
      %s15 = sadd.s32 1, %s11
    $region7: #{model_forward.1} parent=1 // loop_footer_branch
      %10 = sbr.rel target = $region3
    $region8: #{model_forward.1} parent=1 // loop_exit
      _
    %633 = vsyncpa [#allocation3], 1
    %s634 = scalar_lea.sflag [#allocation3], 1
    %635 = vsyncpa %s634, 1

</llo_original>
